<compile_context>
chip_gen: v7x
topology: tpu7x:2x2x1
jax: 0.10.0
libtpu: 0.0.40
codegen_flags: <defaults>
</compile_context>

<pallas_src>
import jax
import jax.numpy as jnp
from jax.experimental import pallas as pl
from jax.experimental.pallas import tpu as pltpu

LANES = 128
_DEFAULT_TILE_ROWS = 1024  # 4 streams x 2 bufs x (1024,128) f32 = 4 MiB VMEM


def _pow_static(x, gamma):
    """(1 - pt)**gamma with static specialization for small integer gamma."""
    g = float(gamma)
    if g == 0.0:
        return jnp.ones_like(x)
    if g == round(g) and 0 < g <= 16:
        n = int(round(g))
        out = x
        for _ in range(n - 1):
            out = out * x
        return out
    return jnp.power(x, g)


def _make_focal_kernel(gamma, has_weight, has_mask, tile_rows):
    """Kernel specialized on which optional streams exist."""
    sub = tile_rows // 8  # tile_rows is always a multiple of 8

    def kernel(*refs):
        it = iter(refs)
        lp_ref = next(it)
        pt_ref = next(it)
        w_ref = next(it) if has_weight else None
        m_ref = next(it) if has_mask else None
        num_ref = next(it)
        den_ref = next(it) if has_mask else None
        acc_num = next(it)
        acc_den = next(it) if has_mask else None

        step = pl.program_id(1)

        @pl.when(step == 0)
        def _init():
            acc_num[...] = jnp.zeros_like(acc_num)
            if has_mask:
                acc_den[...] = jnp.zeros_like(acc_den)

        lp = lp_ref[...].astype(jnp.float32)
        p = pt_ref[...].astype(jnp.float32)
        loss = -_pow_static(1.0 - p, gamma) * lp
        if has_weight:
            loss = loss * w_ref[...].astype(jnp.float32)
        if has_mask:
            m = m_ref[...].astype(jnp.float32)
            loss = loss * m
            # Element-wise VPU adds across sublane groups only (no XLU).
            acc_den[...] += m.reshape(sub, 8, LANES).sum(axis=0)
        acc_num[...] += loss.reshape(sub, 8, LANES).sum(axis=0)

        @pl.when(step == pl.num_programs(1) - 1)
        def _flush():
            # Single cross-lane reduce per slice, done once at the end.
            num_ref[...] = jnp.sum(acc_num[...]).reshape(1, 1, 1)
            if has_mask:
                den_ref[...] = jnp.sum(acc_den[...]).reshape(1, 1, 1)

    return kernel


def focal_loss(log_pt, pt, mask=None, weight=None, gamma=2.0, eps=1e-6,
               tile_rows=_DEFAULT_TILE_ROWS):
    """Pallas implementation of FocalLoss.forward."""
    log_pt = jnp.asarray(log_pt)
    pt = jnp.asarray(pt)
    shape = log_pt.shape
    n_real = log_pt.size
    f32 = jnp.float32

    # --- optional weight handling ------------------------------------------
    weight_scale = None
    has_weight = weight is not None
    if has_weight:
        weight = jnp.asarray(weight)
        if weight.size == 1:
            # Scalar weight: fold into the numerator after the kernel
            # (no extra HBM stream).
            weight_scale = weight.reshape(()).astype(f32)
            has_weight = False
        elif weight.shape != shape:
            # TODO(synk): broadcast small (e.g. per-channel) weights in-kernel
            # instead of materializing a full-size HBM stream.
            weight = jnp.broadcast_to(weight, shape)

    has_mask = mask is not None
    if has_mask:
        mask = jnp.asarray(mask)
        if mask.shape != shape:
            # TODO(synk): same in-kernel broadcast opportunity as for weight.
            mask = jnp.broadcast_to(mask, shape)

    # --- flatten; keep native <=32-bit float dtypes to minimize HBM bytes ---
    def _canon(x):
        if not jnp.issubdtype(x.dtype, jnp.floating) or x.dtype.itemsize > 4:
            x = x.astype(f32)
        return x.reshape(-1)

    streams = [_canon(log_pt), _canon(pt)]
    if has_weight:
        streams.append(_canon(weight))
    if has_mask:
        streams.append(_canon(mask))

    # Sublane granularity: 8 rows for 4-byte dtypes, 16 for 2-byte, 32 for 1B.
    row_mult = max(max(32 // s.dtype.itemsize for s in streams), 8)

    # Tile rows: as large as requested, multiple of row_mult, never more than
    # the (rounded-up) number of rows actually present.
    tile = max(row_mult, (int(tile_rows) // row_mult) * row_mult)
    rows_needed = -(-n_real // LANES)
    rows_rounded = -(-rows_needed // row_mult) * row_mult
    tile = min(tile, rows_rounded)

    # Pad (zeros are neutral for both reduction paths) only when needed.
    block_elems = tile * LANES
    n_pad = -(-n_real // block_elems) * block_elems
    pad = n_pad - n_real
    if pad:
        streams = [jnp.pad(s, (0, pad)) for s in streams]
    rows = n_pad // LANES
    streams = [s.reshape(rows, LANES) for s in streams]

    total_steps = rows // tile
    # 2-way "parallel" slice for v7x megacore (neutral on single-TC chips).
    num_slices = 2 if (total_steps >= 2 and total_steps % 2 == 0) else 1
    steps = total_steps // num_slices

    in_spec = pl.BlockSpec((tile, LANES), lambda c, i: (c * steps + i, 0))
    # 3-D partial outputs so the (1,1,1) block equals the full last two dims.
    out_spec = pl.BlockSpec((1, 1, 1), lambda c, i: (c, 0, 0))

    out_shapes = [jax.ShapeDtypeStruct((num_slices, 1, 1), f32)]
    out_specs = [out_spec]
    scratch = [pltpu.VMEM((8, LANES), f32)]
    if has_mask:
        out_shapes.append(jax.ShapeDtypeStruct((num_slices, 1, 1), f32))
        out_specs.append(out_spec)
        scratch.append(pltpu.VMEM((8, LANES), f32))

    kernel = _make_focal_kernel(float(gamma), has_weight, has_mask, tile)

    outs = pl.pallas_call(
        kernel,
        out_shape=tuple(out_shapes),
        grid_spec=pltpu.PrefetchScalarGridSpec(
            num_scalar_prefetch=0,
            grid=(num_slices, steps),
            in_specs=[in_spec] * len(streams),
            out_specs=tuple(out_specs),
            scratch_shapes=scratch),
        compiler_params=pltpu.CompilerParams(
            dimension_semantics=("parallel", "arbitrary")),
    )(*streams)

    num = outs[0].sum()
    if weight_scale is not None:
        num = num * weight_scale
    if has_mask:
        den = outs[1].sum()
        return num / jnp.maximum(den, eps)
    # Mean over the *real* (unpadded) element count, computed host-side.
    return num / jnp.float32(n_real)


def _focal_loss_ref(log_pt, pt, mask=None, weight=None, gamma=2.0, eps=1e-6):
    loss = -jnp.power(1.0 - pt, gamma) * log_pt
    if weight is not None:
        loss = loss * weight
    if mask is not None:
        return (loss * mask).sum() / jnp.maximum(mask.sum(), eps)
    return loss.mean()


if __name__ == "__main__":
    key = jax.random.PRNGKey(0)
    k1, k2, k3 = jax.random.split(key, 3)

    # NCHW-style probability maps, batch=2, channels=4, spatial=16x16.
    shape = (2, 4, 16, 16)
    pt = jax.random.uniform(k1, shape, dtype=jnp.float32,
                            minval=0.05, maxval=0.95)
    log_pt = jnp.log(pt)
    mask = (jax.random.uniform(k2, shape) > 0.5).astype(jnp.float32)
    weight = jax.random.uniform(k3, shape, dtype=jnp.float32,
                                minval=0.5, maxval=2.0)

    # Masked + weighted path (4 HBM streams).
    out = jax.block_until_ready(
        focal_loss(log_pt, pt, mask=mask, weight=weight, gamma=2.0, eps=1e-6))
    ref = _focal_loss_ref(log_pt, pt, mask=mask, weight=weight,
                          gamma=2.0, eps=1e-6)
    assert jnp.allclose(out, ref, rtol=2e-3, atol=2e-5), (out, ref)

    # Mean path (no mask, no weight) -- only 2 HBM streams.
    out2 = jax.block_until_ready(focal_loss(log_pt, pt, gamma=2.0, eps=1e-6))
    ref2 = _focal_loss_ref(log_pt, pt, gamma=2.0, eps=1e-6)
    assert jnp.allclose(out2, ref2, rtol=2e-3, atol=2e-5), (out2, ref2)

    # Mask-only path (3 HBM streams).
    out3 = jax.block_until_ready(focal_loss(log_pt, pt, mask=mask))
    ref3 = _focal_loss_ref(log_pt, pt, mask=mask)
    assert jnp.allclose(out3, ref3, rtol=2e-3, atol=2e-5), (out3, ref3)

    # Native bf16 streaming (cast to f32 inside the kernel, no wrapper astype).
    lp_bf16 = log_pt.astype(jnp.bfloat16)
    pt_bf16 = pt.astype(jnp.bfloat16)
    out4 = jax.block_until_ready(focal_loss(lp_bf16, pt_bf16))
    ref4 = _focal_loss_ref(lp_bf16.astype(jnp.float32),
                           pt_bf16.astype(jnp.float32))
    assert jnp.allclose(out4, ref4, rtol=2e-3, atol=1e-4), (out4, ref4)

    print("KERNEL_OK")
</pallas_src>

<mosaic_0001>
module attributes {stable_mosaic.version = 11 : i64} {
  func.func @kernel(%arg0: i32, %arg1: i32, %arg2: memref<16x128xf32, #tpu.memory_space<vmem>>, %arg3: memref<16x128xf32, #tpu.memory_space<vmem>>, %arg4: memref<16x128xf32, #tpu.memory_space<vmem>>, %arg5: memref<16x128xf32, #tpu.memory_space<vmem>>, %arg6: memref<1x1x1xf32, #tpu.memory_space<vmem>>, %arg7: memref<1x1x1xf32, #tpu.memory_space<vmem>>, %arg8: memref<8x128xf32, #tpu.memory_space<vmem>>, %arg9: memref<8x128xf32, #tpu.memory_space<vmem>>) attributes {dimension_semantics = [#tpu.dimension_semantics<parallel>, #tpu.dimension_semantics<arbitrary>], iteration_bounds = array<i64: 1, 1>, scalar_prefetch = 0 : i64, scratch_operands = 2 : i64, tpu.core_type = #tpu.core_type<tc>, window_params = [{transform_indices = @transform_0, window_bounds = array<i64: 16, 128>}, {transform_indices = @transform_1, window_bounds = array<i64: 16, 128>}, {transform_indices = @transform_2, window_bounds = array<i64: 16, 128>}, {transform_indices = @transform_3, window_bounds = array<i64: 16, 128>}, {transform_indices = @transform_4, window_bounds = array<i64: 1, 1, 1>}, {transform_indices = @transform_5, window_bounds = array<i64: 1, 1, 1>}]} {
    %c0_i32 = arith.constant 0 : i32
    %0 = arith.cmpi eq, %arg1, %c0_i32 : i32
    %1 = arith.extui %0 : i1 to i32
    %c0_i32_0 = arith.constant 0 : i32
    %2 = arith.cmpi ne, %1, %c0_i32_0 : i32
    scf.if %2 {
      %cst_21 = arith.constant 0.000000e+00 : f32
      %28 = vector.broadcast %cst_21 : f32 to vector<8x128xf32>
      %c0_22 = arith.constant 0 : index
      %c0_23 = arith.constant 0 : index
      %29 = vector.load %arg8[%c0_22, %c0_23] : memref<8x128xf32, #tpu.memory_space<vmem>>, vector<8x128xf32>
      tpu.vector_store %arg8[%c0_22, %c0_23], %28 {strides = array<i32>} : memref<8x128xf32, #tpu.memory_space<vmem>>, vector<8x128xf32>,
      %cst_24 = arith.constant 0.000000e+00 : f32
      %30 = vector.broadcast %cst_24 : f32 to vector<8x128xf32>
      %c0_25 = arith.constant 0 : index
      %c0_26 = arith.constant 0 : index
      %31 = vector.load %arg9[%c0_25, %c0_26] : memref<8x128xf32, #tpu.memory_space<vmem>>, vector<8x128xf32>
      tpu.vector_store %arg9[%c0_25, %c0_26], %30 {strides = array<i32>} : memref<8x128xf32, #tpu.memory_space<vmem>>, vector<8x128xf32>,
    } else {
    }
    %c0 = arith.constant 0 : index
    %c0_1 = arith.constant 0 : index
    %3 = vector.load %arg2[%c0, %c0_1] : memref<16x128xf32, #tpu.memory_space<vmem>>, vector<16x128xf32>
    %c0_2 = arith.constant 0 : index
    %c0_3 = arith.constant 0 : index
    %4 = vector.load %arg3[%c0_2, %c0_3] : memref<16x128xf32, #tpu.memory_space<vmem>>, vector<16x128xf32>
    %cst = arith.constant 1.000000e+00 : f32
    %5 = vector.broadcast %cst : f32 to vector<16x128xf32>
    %6 = arith.subf %5, %4 : vector<16x128xf32>
    %7 = arith.mulf %6, %6 : vector<16x128xf32>
    %cst_4 = arith.constant 0.000000e+00 : f32
    %8 = vector.broadcast %cst_4 : f32 to vector<16x128xf32>
    %9 = arith.subf %8, %7 : vector<16x128xf32>
    %10 = arith.mulf %9, %3 : vector<16x128xf32>
    %c0_5 = arith.constant 0 : index
    %c0_6 = arith.constant 0 : index
    %11 = vector.load %arg4[%c0_5, %c0_6] : memref<16x128xf32, #tpu.memory_space<vmem>>, vector<16x128xf32>
    %12 = arith.mulf %10, %11 : vector<16x128xf32>
    %c0_7 = arith.constant 0 : index
    %c0_8 = arith.constant 0 : index
    %13 = vector.load %arg5[%c0_7, %c0_8] : memref<16x128xf32, #tpu.memory_space<vmem>>, vector<16x128xf32>
    %14 = arith.mulf %12, %13 : vector<16x128xf32>
    %c0_9 = arith.constant 0 : index
    %c0_10 = arith.constant 0 : index
    %15 = vector.load %arg9[%c0_9, %c0_10] : memref<8x128xf32, #tpu.memory_space<vmem>>, vector<8x128xf32>
    %16 = vector.shape_cast %13 : vector<16x128xf32> to vector<2x8x128xf32>
    %cst_11 = arith.constant dense<0.000000e+00> : vector<8x128xf32>
    %17 = vector.multi_reduction <add>, %16, %cst_11 [0] : vector<2x8x128xf32> to vector<8x128xf32>
    %18 = arith.addf %15, %17 : vector<8x128xf32>
    %c0_12 = arith.constant 0 : index
    %c0_13 = arith.constant 0 : index
    %19 = vector.load %arg9[%c0_12, %c0_13] : memref<8x128xf32, #tpu.memory_space<vmem>>, vector<8x128xf32>
    tpu.vector_store %arg9[%c0_12, %c0_13], %18 {strides = array<i32>} : memref<8x128xf32, #tpu.memory_space<vmem>>, vector<8x128xf32>,
    %c0_14 = arith.constant 0 : index
    %c0_15 = arith.constant 0 : index
    %20 = vector.load %arg8[%c0_14, %c0_15] : memref<8x128xf32, #tpu.memory_space<vmem>>, vector<8x128xf32>
    %21 = vector.shape_cast %14 : vector<16x128xf32> to vector<2x8x128xf32>
    %cst_16 = arith.constant dense<0.000000e+00> : vector<8x128xf32>
    %22 = vector.multi_reduction <add>, %21, %cst_16 [0] : vector<2x8x128xf32> to vector<8x128xf32>
    %23 = arith.addf %20, %22 : vector<8x128xf32>
    %c0_17 = arith.constant 0 : index
    %c0_18 = arith.constant 0 : index
    %24 = vector.load %arg8[%c0_17, %c0_18] : memref<8x128xf32, #tpu.memory_space<vmem>>, vector<8x128xf32>
    tpu.vector_store %arg8[%c0_17, %c0_18], %23 {strides = array<i32>} : memref<8x128xf32, #tpu.memory_space<vmem>>, vector<8x128xf32>,
    %c0_i32_19 = arith.constant 0 : i32
    %25 = arith.cmpi eq, %arg1, %c0_i32_19 : i32
    %26 = arith.extui %25 : i1 to i32
    %c0_i32_20 = arith.constant 0 : i32
    %27 = arith.cmpi ne, %26, %c0_i32_20 : i32
    scf.if %27 {
      %c0_21 = arith.constant 0 : index
      %c0_22 = arith.constant 0 : index
      %28 = vector.load %arg8[%c0_21, %c0_22] : memref<8x128xf32, #tpu.memory_space<vmem>>, vector<8x128xf32>
      %29 = vector.shape_cast %28 : vector<8x128xf32> to vector<1x8x128xf32>
      %cst_23 = arith.constant dense<0.000000e+00> : vector<1xf32>
      %30 = vector.multi_reduction <add>, %29, %cst_23 [1, 2] : vector<1x8x128xf32> to vector<1xf32>
      %31 = vector.shape_cast %30 : vector<1xf32> to vector<1x1x1xf32>
      %32 = vector.extract %31[0, 0, 0] : f32 from vector<1x1x1xf32>
      %33 = vector.broadcast %32 : f32 to vector<1x1x1xf32>
      %c0_24 = arith.constant 0 : index
      %c0_25 = arith.constant 0 : index
      %c0_26 = arith.constant 0 : index
      %34 = vector.load %arg6[%c0_24, %c0_25, %c0_26] : memref<1x1x1xf32, #tpu.memory_space<vmem>>, vector<1x1x1xf32>
      tpu.vector_store %arg6[%c0_24, %c0_25, %c0_26], %33 {strides = array<i32>} : memref<1x1x1xf32, #tpu.memory_space<vmem>>, vector<1x1x1xf32>,
      %c0_27 = arith.constant 0 : index
      %c0_28 = arith.constant 0 : index
      %35 = vector.load %arg9[%c0_27, %c0_28] : memref<8x128xf32, #tpu.memory_space<vmem>>, vector<8x128xf32>
      %36 = vector.shape_cast %35 : vector<8x128xf32> to vector<1x8x128xf32>
      %cst_29 = arith.constant dense<0.000000e+00> : vector<1xf32>
      %37 = vector.multi_reduction <add>, %36, %cst_29 [1, 2] : vector<1x8x128xf32> to vector<1xf32>
      %38 = vector.shape_cast %37 : vector<1xf32> to vector<1x1x1xf32>
      %39 = vector.extract %38[0, 0, 0] : f32 from vector<1x1x1xf32>
      %40 = vector.broadcast %39 : f32 to vector<1x1x1xf32>
      %c0_30 = arith.constant 0 : index
      %c0_31 = arith.constant 0 : index
      %c0_32 = arith.constant 0 : index
      %41 = vector.load %arg7[%c0_30, %c0_31, %c0_32] : memref<1x1x1xf32, #tpu.memory_space<vmem>>, vector<1x1x1xf32>
      tpu.vector_store %arg7[%c0_30, %c0_31, %c0_32], %40 {strides = array<i32>} : memref<1x1x1xf32, #tpu.memory_space<vmem>>, vector<1x1x1xf32>,
    } else {
    }
    return
  }
  func.func @transform_0(%arg0: i32, %arg1: i32) -> (i32, i32) {
    %c1_i32 = arith.constant 1 : i32
    %0 = arith.muli %arg0, %c1_i32 : i32
    %1 = arith.addi %0, %arg1 : i32
    %c0_i32 = arith.constant 0 : i32
    %c0_i32_0 = arith.constant 0 : i32
    return %1, %c0_i32 : i32, i32
  }
  func.func @transform_1(%arg0: i32, %arg1: i32) -> (i32, i32) {
    %c1_i32 = arith.constant 1 : i32
    %0 = arith.muli %arg0, %c1_i32 : i32
    %1 = arith.addi %0, %arg1 : i32
    %c0_i32 = arith.constant 0 : i32
    %c0_i32_0 = arith.constant 0 : i32
    return %1, %c0_i32 : i32, i32
  }
  func.func @transform_2(%arg0: i32, %arg1: i32) -> (i32, i32) {
    %c1_i32 = arith.constant 1 : i32
    %0 = arith.muli %arg0, %c1_i32 : i32
    %1 = arith.addi %0, %arg1 : i32
    %c0_i32 = arith.constant 0 : i32
    %c0_i32_0 = arith.constant 0 : i32
    return %1, %c0_i32 : i32, i32
  }
  func.func @transform_3(%arg0: i32, %arg1: i32) -> (i32, i32) {
    %c1_i32 = arith.constant 1 : i32
    %0 = arith.muli %arg0, %c1_i32 : i32
    %1 = arith.addi %0, %arg1 : i32
    %c0_i32 = arith.constant 0 : i32
    %c0_i32_0 = arith.constant 0 : i32
    return %1, %c0_i32 : i32, i32
  }
  func.func @transform_4(%arg0: i32, %arg1: i32) -> (i32, i32, i32) {
    %c0_i32 = arith.constant 0 : i32
    %c0_i32_0 = arith.constant 0 : i32
    %c0_i32_1 = arith.constant 0 : i32
    return %arg0, %c0_i32, %c0_i32_0 : i32, i32, i32
  }
  func.func @transform_5(%arg0: i32, %arg1: i32) -> (i32, i32, i32) {
    %c0_i32 = arith.constant 0 : i32
    %c0_i32_0 = arith.constant 0 : i32
    %c0_i32_1 = arith.constant 0 : i32
    return %arg0, %c0_i32, %c0_i32_0 : i32, i32, i32
  }
}

</mosaic_0001>

<llo_original>
// kernel: tpu_custom_call.1
$region0: #{tpu_custom_call.1}
  #allocation0 [shape = 'u32[]', space=smem, size = 0x4, offset = 0x4, fixed_abs, tag = 'smem constant byte address 0x4 - core index']
  #allocation1 [shape = 'u32[144,128]{1,0:T(1,128)}', space=vmem, size = 0x12000, scoped, tag = 'internal scratch']
  #allocation2 [shape = 'f32[8,128]{1,0:T(8,128)}', space=vmem, size = 0x1000, scoped, tag = 'scratch operand']
  #allocation3 [shape = 'f32[8,128]{1,0:T(8,128)}', space=vmem, size = 0x1000, scoped, tag = 'scratch operand']
  %s0 = inlined_call_operand.hbm [shape: f32[16,128], index: 0, kind: input, shape index: {}]
  %s1 = inlined_call_operand.hbm [shape: f32[16,128], index: 1, kind: input, shape index: {}]
  %s2 = inlined_call_operand.hbm [shape: f32[16,128], index: 2, kind: input, shape index: {}]
  %s3 = inlined_call_operand.hbm [shape: f32[16,128], index: 3, kind: input, shape index: {}]
  %s4 = inlined_call_operand.hbm [shape: f32[1,1,1], index: 4, kind: output, shape index: {0}]
  %s5 = inlined_call_operand.hbm [shape: f32[1,1,1], index: 5, kind: output, shape index: {1}]
  %6 = xla_tuple %s4, %s5
  %s7 = sld [smem:[#allocation0]]
  $region58: #{tpu_custom_call.1} parent=0
    _
  %s9 = ssub.s32 1, %s7
  %s10 = scalar_select 0, %s9, %s7
  $region1: #{tpu_custom_call.1} parent=0
    #allocation4 [shape = 'u8[8192]{0}', space=vmem, size = 0x2000, scoped, tag = 'input window, operand 0, single buffered']
    #allocation5 [shape = 's32[1]{0}', space=sflag, size = 0x4, scoped, tag = 'scoped memory for tpu_custom_call.1']
    #allocation6 [shape = 's32[1]{0}', space=sflag, size = 0x4, scoped, tag = 'scoped memory for tpu_custom_call.1']
    #allocation7 [shape = 'u8[8192]{0}', space=vmem, size = 0x2000, scoped, tag = 'input window, operand 1, single buffered']
    #allocation8 [shape = 's32[1]{0}', space=sflag, size = 0x4, scoped, tag = 'scoped memory for tpu_custom_call.1']
    #allocation9 [shape = 'u8[8192]{0}', space=vmem, size = 0x2000, scoped, tag = 'input window, operand 2, single buffered']
    #allocation10 [shape = 'u8[8192]{0}', space=vmem, size = 0x2000, scoped, tag = 'input window, operand 3, single buffered']
    #allocation11 [shape = 's32[1]{0}', space=sflag, size = 0x4, scoped, tag = 'scoped memory for tpu_custom_call.1']
    #allocation12 [shape = 'u8[512]{0}', space=vmem, size = 0x400, scoped, tag = 'output window, operand 0, single buffered']
    #allocation13 [shape = 'u8[512]{0}', space=vmem, size = 0x400, scoped, tag = 'output window, operand 1, single buffered']
    #allocation14 [shape = 's32[1]{0}', space=sflag, size = 0x4, scoped, tag = 'scoped memory for tpu_custom_call.1']
    %11 = vsyncpa [#allocation5], 0
    %12 = vsyncpa [#allocation8], 0
    %13 = vsyncpa [#allocation11], 0
    %14 = vsyncpa [#allocation6], 0
    %15 = vsyncpa [#allocation14], 0
    // Predicated region
    $region2: #{tpu_custom_call.1} parent=1 // pred_check
      _
    $region3: #{tpu_custom_call.1} parent=1 // pred_check_branch
      %17 = sbr.rel (0) target = $region5
    $region4: #{tpu_custom_call.1} parent=1 // pred_region
      %s18 = sadd.s32 0, 0
      %s19 = smul.u32 2, %s18
      %s21 = ssub.s32 256, 256
      %22 = vsyncadd [#allocation5], %s21
      %s23 = smul.addr %s19, 128
      %s24 = scalar_lea.hbm %s0, %s23
      %s25 = sshll.u32 [#allocation4], 4
      %s26 = int_to_ptr.vmem [resolvable:$true] %s25
      %31 = dma.hbm_to_vmem [thread:$0]  %s24, 256, %s26, [#allocation5], 128, 128, 8
    $region5: #{tpu_custom_call.1} parent=1 // pred_fallthru
      _
    // Predicated region
    $region6: #{tpu_custom_call.1} parent=1 // pred_check
      _
    $region7: #{tpu_custom_call.1} parent=1 // pred_check_branch
      %33 = sbr.rel (0) target = $region9
    $region8: #{tpu_custom_call.1} parent=1 // pred_region
      %s34 = sadd.s32 0, 0
      %s35 = smul.u32 2, %s34
      %s37 = ssub.s32 256, 256
      %38 = vsyncadd [#allocation8], %s37
      %s39 = smul.addr %s35, 128
      %s40 = scalar_lea.hbm %s1, %s39
      %s41 = sshll.u32 [#allocation7], 4
      %s42 = int_to_ptr.vmem [resolvable:$true] %s41
      %47 = dma.hbm_to_vmem [thread:$0]  %s40, 256, %s42, [#allocation8], 128, 128, 8
    $region9: #{tpu_custom_call.1} parent=1 // pred_fallthru
      _
    // Predicated region
    $region10: #{tpu_custom_call.1} parent=1 // pred_check
      _
    $region11: #{tpu_custom_call.1} parent=1 // pred_check_branch
      %49 = sbr.rel (0) target = $region13
    $region12: #{tpu_custom_call.1} parent=1 // pred_region
      %s50 = sadd.s32 0, 0
      %s51 = smul.u32 2, %s50
      %s53 = ssub.s32 256, 256
      %54 = vsyncadd [#allocation8], %s53
      %s55 = smul.addr %s51, 128
      %s56 = scalar_lea.hbm %s2, %s55
      %s57 = sshll.u32 [#allocation9], 4
      %s58 = int_to_ptr.vmem [resolvable:$true] %s57
      %63 = dma.hbm_to_vmem [thread:$0]  %s56, 256, %s58, [#allocation8], 128, 128, 8
    $region13: #{tpu_custom_call.1} parent=1 // pred_fallthru
      _
    // Predicated region
    $region14: #{tpu_custom_call.1} parent=1 // pred_check
      _
    $region15: #{tpu_custom_call.1} parent=1 // pred_check_branch
      %65 = sbr.rel (0) target = $region17
    $region16: #{tpu_custom_call.1} parent=1 // pred_region
      %s66 = sadd.s32 0, 0
      %s67 = smul.u32 2, %s66
      %s69 = ssub.s32 256, 256
      %70 = vsyncadd [#allocation11], %s69
      %s71 = smul.addr %s67, 128
      %s72 = scalar_lea.hbm %s3, %s71
      %s73 = sshll.u32 [#allocation10], 4
      %s74 = int_to_ptr.vmem [resolvable:$true] %s73
      %79 = dma.hbm_to_vmem [thread:$0]  %s72, 256, %s74, [#allocation11], 128, 128, 8
    $region17: #{tpu_custom_call.1} parent=1 // pred_fallthru
      _
    // Predicated region
    $region18: #{tpu_custom_call.1} parent=1 // pred_check
      _
    $region19: #{tpu_custom_call.1} parent=1 // pred_check_branch
      %81 = sbr.rel (0) target = $region21
    $region20: #{tpu_custom_call.1} parent=1 // pred_region
      %82 = dma.done [#allocation5], 256
    $region21: #{tpu_custom_call.1} parent=1 // pred_fallthru
      _
    // Predicated region
    $region22: #{tpu_custom_call.1} parent=1 // pred_check
      _
    $region23: #{tpu_custom_call.1} parent=1 // pred_check_branch
      %84 = sbr.rel (0) target = $region25
    $region24: #{tpu_custom_call.1} parent=1 // pred_region
      %85 = dma.done [#allocation8], 256
    $region25: #{tpu_custom_call.1} parent=1 // pred_fallthru
      _
    // Predicated region
    $region26: #{tpu_custom_call.1} parent=1 // pred_check
      _
    $region27: #{tpu_custom_call.1} parent=1 // pred_check_branch
      %87 = sbr.rel (0) target = $region29
    $region28: #{tpu_custom_call.1} parent=1 // pred_region
      %88 = dma.done [#allocation8], 256
    $region29: #{tpu_custom_call.1} parent=1 // pred_fallthru
      _
    // Predicated region
    $region30: #{tpu_custom_call.1} parent=1 // pred_check
      _
    $region31: #{tpu_custom_call.1} parent=1 // pred_check_branch
      %90 = sbr.rel (0) target = $region33
    $region32: #{tpu_custom_call.1} parent=1 // pred_region
      %91 = dma.done [#allocation11], 256
    $region33: #{tpu_custom_call.1} parent=1 // pred_fallthru
      _
    %s92 = sadd.s32 0, 0
    %s93 = smul.u32 2, %s92
    %s94 = sadd.s32 0, 0
    %s95 = smul.u32 2, %s94
    %s96 = sadd.s32 0, 0
    %s97 = smul.u32 2, %s96
    %s98 = sadd.s32 0, 0
    %s99 = smul.u32 2, %s98
    %p100 = scmp.eq.s32.totalorder 0, 0
    // Predicated region
    $region34: #{tpu_custom_call.1} parent=1 // pred_check
      %p101 = pneg %p100
    $region35: #{tpu_custom_call.1} parent=1 // pred_check_branch
      %103 = sbr.rel (%p101) target = $region37
    $region36: #{tpu_custom_call.1} parent=1 // pred_region
      %104 = vst [vmem:[#allocation2] sm:$0xff] 0.0
      %105 = vst [vmem:[#allocation3] sm:$0xff] 0.0
    $region37: #{tpu_custom_call.1} parent=1 // pred_fallthru
      _
    %v106 = vld [vmem:[#allocation4] sm:$0xff]
    %v107 = vld [vmem:[#allocation4 + $0x8] sm:$0xff]
    %v108 = vld [vmem:[#allocation7] sm:$0xff]
    %v109 = vld [vmem:[#allocation7 + $0x8] sm:$0xff]
    %v110 = vsub.f32 1.0, %v108
    %v111 = vsub.f32 1.0, %v109
    %v112 = vmul.f32 %v110, %v110
    %v113 = vmul.f32 %v111, %v111
    %v114 = vsub.f32 0.0, %v112
    %v115 = vsub.f32 0.0, %v113
    %v116 = vmul.f32 %v114, %v106
    %v117 = vmul.f32 %v115, %v107
    %v118 = vld [vmem:[#allocation9] sm:$0xff]
    %v119 = vld [vmem:[#allocation9 + $0x8] sm:$0xff]
    %v120 = vmul.f32 %v116, %v118
    %v121 = vmul.f32 %v117, %v119
    %v122 = vld [vmem:[#allocation10] sm:$0xff]
    %v123 = vld [vmem:[#allocation10 + $0x8] sm:$0xff]
    %v124 = vmul.f32 %v120, %v122
    %v125 = vmul.f32 %v121, %v123
    %v126 = vld [vmem:[#allocation3] sm:$0xff]
    %v127 = vadd.f32 %v122, %v123
    %v128 = vadd.f32 %v126, %v127
    %129 = vst [vmem:[#allocation3] sm:$0xff] %v128
    %v130 = vld [vmem:[#allocation2] sm:$0xff]
    %v131 = vadd.f32 %v124, %v125
    %v132 = vadd.f32 %v130, %v131
    %133 = vst [vmem:[#allocation2] sm:$0xff] %v132
    // Predicated region
    $region38: #{tpu_custom_call.1} parent=1 // pred_check
      %p134 = pneg %p100
    $region39: #{tpu_custom_call.1} parent=1 // pred_check_branch
      %136 = sbr.rel (%p134) target = $region41
    $region40: #{tpu_custom_call.1} parent=1 // pred_region
      %v137 = vld [vmem:[#allocation2] sm:$0xff]
      %138 = vadd.xlane.f32.xlu0 %v137
      %v139 = vpop.xlane.xlu0 %138
      %v140 = vrot.slane %v139, 4
      %v141 = vadd.f32 %v139, %v140
      %v142 = vrot.slane %v141, 2
      %v143 = vadd.f32 %v141, %v142
      %v144 = vrot.slane %v143, 1
      %v145 = vadd.f32 %v143, %v144
      %s146 = vtos %v145
      %v147 = vstv %s146
      %vm148 = vcmask 0
      %149 = vst.msk [vmem:[#allocation12] sm:$0x1] %vm148, %v147
      %v150 = vld [vmem:[#allocation3] sm:$0xff]
      %151 = vadd.xlane.f32.xlu0 %v150
      %v152 = vpop.xlane.xlu0 %151
      %v153 = vrot.slane %v152, 4
      %v154 = vadd.f32 %v152, %v153
      %v155 = vrot.slane %v154, 2
      %v156 = vadd.f32 %v154, %v155
      %v157 = vrot.slane %v156, 1
      %v158 = vadd.f32 %v156, %v157
      %s159 = vtos %v158
      %v160 = vstv %s159
      %161 = vst.msk [vmem:[#allocation13] sm:$0x1] %vm148, %v160
    $region41: #{tpu_custom_call.1} parent=1 // pred_fallthru
      _
    // Predicated region
    $region42: #{tpu_custom_call.1} parent=1 // pred_check
      _
    $region43: #{tpu_custom_call.1} parent=1 // pred_check_branch
      %163 = sbr.rel (0) target = $region45
    $region44: #{tpu_custom_call.1} parent=1 // pred_region
      %s165 = ssub.s32 16, 16
      %166 = vsyncadd [#allocation6], %s165
      %s168 = sshll.u32 [#allocation12], 4
      %s169 = int_to_ptr.vmem [resolvable:$true] %s168
      %171 = dma.vmem_to_hbm [thread:$0]  %s169, 16, %s4, [#allocation6]
    $region45: #{tpu_custom_call.1} parent=1 // pred_fallthru
      _
    // Predicated region
    $region46: #{tpu_custom_call.1} parent=1 // pred_check
      _
    $region47: #{tpu_custom_call.1} parent=1 // pred_check_branch
      %173 = sbr.rel (0) target = $region49
    $region48: #{tpu_custom_call.1} parent=1 // pred_region
      %s175 = ssub.s32 16, 16
      %176 = vsyncadd [#allocation14], %s175
      %s178 = sshll.u32 [#allocation13], 4
      %s179 = int_to_ptr.vmem [resolvable:$true] %s178
      %181 = dma.vmem_to_hbm [thread:$0]  %s179, 16, %s5, [#allocation14]
    $region49: #{tpu_custom_call.1} parent=1 // pred_fallthru
      _
    // Predicated region
    $region50: #{tpu_custom_call.1} parent=1 // pred_check
      _
    $region51: #{tpu_custom_call.1} parent=1 // pred_check_branch
      %183 = sbr.rel (0) target = $region53
    $region52: #{tpu_custom_call.1} parent=1 // pred_region
      %184 = dma.done [#allocation6], 16
    $region53: #{tpu_custom_call.1} parent=1 // pred_fallthru
      _
    // Predicated region
    $region54: #{tpu_custom_call.1} parent=1 // pred_check
      _
    $region55: #{tpu_custom_call.1} parent=1 // pred_check_branch
      %186 = sbr.rel (0) target = $region57
    $region56: #{tpu_custom_call.1} parent=1 // pred_region
      %187 = dma.done [#allocation14], 16
    $region57: #{tpu_custom_call.1} parent=1 // pred_fallthru
      _
    %188 = vsyncpa [#allocation5], 1
    %189 = vsyncpa [#allocation8], 1
    %190 = vsyncpa [#allocation11], 1
    %191 = vsyncpa [#allocation6], 1
    %192 = vsyncpa [#allocation14], 1

</llo_original>
